<compile_context>
chip_gen: v6e
topology: v6e:2x2x1
jax: 0.10.0
libtpu: 0.0.40
codegen_flags: <defaults>
</compile_context>

<pallas_src>
import jax
import jax.numpy as jnp
import numpy as np
from jax.experimental import pallas as pl
from jax.experimental.pallas import tpu as pltpu


def _pblstm_kernel(x_ref, wih_ref, bih_ref, whh_f_ref, whh_b_ref,
                   out_f_ref, out_b_ref, hn_ref, cn_ref,
                   xgf_s, xgb_s):
    """Bidirectional LSTM over a time-major [T, bb, 2D] batch tile."""
    T, bb, D2 = x_ref.shape
    H = whh_f_ref.shape[0]
    G = 4 * H
    f32 = jnp.float32
    sig = jax.nn.sigmoid

    # ---- hoisted input projections: one MXU matmul covering every timestep
    # and BOTH directions (W_ih fused to [D2, 8H]) -------------------------
    x2 = x_ref[...].reshape(T * bb, D2)
    xg = jnp.dot(x2, wih_ref[...], preferred_element_type=f32) + bih_ref[...]
    xgf_s[...] = xg[:, 0:G].reshape(T, bb, G)
    xgb_s[...] = xg[:, G:2 * G].reshape(T, bb, G)

    def cell(pre, h, c, whh_ref):
        # single fused gate dot per step/direction (i, f, g, o order, PyTorch)
        g = pre + jnp.dot(h, whh_ref[...], preferred_element_type=f32)
        i = sig(g[:, 0:H])
        f = sig(g[:, H:2 * H])
        gg = jnp.tanh(g[:, 2 * H:3 * H])
        o = sig(g[:, 3 * H:4 * H])
        cn = f * c + i * gg
        hn = o * jnp.tanh(cn)
        return hn, cn

    def body(t, carry):
        hf, cf, hb, cb = carry
        tb = T - 1 - t
        hf, cf = cell(xgf_s[t], hf, cf, whh_f_ref)     # forward direction
        hb, cb = cell(xgb_s[tb], hb, cb, whh_b_ref)    # backward direction
        out_f_ref[t] = hf
        out_b_ref[tb] = hb
        return hf, cf, hb, cb

    z = jnp.zeros((bb, H), f32)
    hf, cf, hb, cb = jax.lax.fori_loop(0, T, body, (z, z, z, z))

    # final states: index 0 = forward direction, 1 = backward (PyTorch order)
    hn_ref[0] = hf
    hn_ref[1] = hb
    cn_ref[0] = cf
    cn_ref[1] = cb


def pblstm_forward_pallas(input_x, state_len, params, sample_rate=2):
    B, S, D = input_x.shape
    assert sample_rate > 1

    # ---- 'concat' pyramidal downsampling (done by XLA in the wrapper) ----
    if S % sample_rate != 0:
        input_x = input_x[:, :-(S % sample_rate), :]
    T = input_x.shape[1] // sample_rate
    D2 = D * sample_rate
    x = input_x.reshape(B, T, D2)
    new_len = ((state_len - state_len % sample_rate) // sample_rate).astype(jnp.int32)

    x_tm = jnp.transpose(x, (1, 0, 2))                 # time-major [T, B, 2D]

    H = params['whh_f'].shape[0]
    G = 4 * H
    # fuse fwd/bwd input-projection weights -> one MXU matmul in the kernel
    wih = jnp.concatenate([params['wih_f'], params['wih_b']], axis=1)   # [D2, 8H]
    bih = jnp.concatenate([params['b_f'], params['b_b']], axis=1)       # [1, 8H]

    # batch tiling: 'parallel' grid axis (lets v7x split B across its 2 TCs)
    bb = 8 if (B % 8 == 0) else B
    grid = (B // bb,)

    def bcast_spec(shape):
        n = len(shape)
        return pl.BlockSpec(shape, lambda i, _n=n: (0,) * _n)

    in_specs = [
        pl.BlockSpec((T, bb, D2), lambda i: (0, i, 0)),
        bcast_spec(wih.shape),
        bcast_spec(bih.shape),
        bcast_spec(params['whh_f'].shape),
        bcast_spec(params['whh_b'].shape),
    ]
    out_specs = [
        pl.BlockSpec((T, bb, H), lambda i: (0, i, 0)),
        pl.BlockSpec((T, bb, H), lambda i: (0, i, 0)),
        pl.BlockSpec((2, bb, H), lambda i: (0, i, 0)),
        pl.BlockSpec((2, bb, H), lambda i: (0, i, 0)),
    ]
    out_shape = (
        jax.ShapeDtypeStruct((T, B, H), jnp.float32),   # forward hidden, time-major
        jax.ShapeDtypeStruct((T, B, H), jnp.float32),   # backward hidden, time-major
        jax.ShapeDtypeStruct((2, B, H), jnp.float32),   # h_n
        jax.ShapeDtypeStruct((2, B, H), jnp.float32),   # c_n
    )

    out_f, out_b, hn, cn = pl.pallas_call(
        _pblstm_kernel,
        grid=grid,
        in_specs=in_specs,
        out_specs=out_specs,
        out_shape=out_shape,
        scratch_shapes=[pltpu.VMEM((T, bb, G), jnp.float32),   # hoisted fwd input gates
                        pltpu.VMEM((T, bb, G), jnp.float32)],  # hoisted bwd input gates
        compiler_params=pltpu.CompilerParams(
            dimension_semantics=("parallel",)),
    )(x_tm, wih, bih, params['whh_f'], params['whh_b'])

    out = jnp.concatenate([out_f, out_b], axis=-1)     # [T, B, hidden_dim]
    out = jnp.transpose(out, (1, 0, 2))                # [B, T, hidden_dim]
    return out, (hn, cn), new_len


def pblstm_forward_ref(input_x, state_len, params, sample_rate=2):
    """Pure-JAX reference mirroring the PyTorch eval-mode forward (no packing)."""
    B, S, D = input_x.shape
    if S % sample_rate != 0:
        input_x = input_x[:, :-(S % sample_rate), :]
    T = input_x.shape[1] // sample_rate
    x = input_x.reshape(B, T, D * sample_rate)
    new_len = ((state_len - state_len % sample_rate) // sample_rate).astype(jnp.int32)
    H = params['whh_f'].shape[0]

    def run(time_order, wih, whh, b):
        h = jnp.zeros((B, H), jnp.float32)
        c = jnp.zeros((B, H), jnp.float32)
        hs = {}
        for t in time_order:
            g = x[:, t, :] @ wih + h @ whh + b
            i = jax.nn.sigmoid(g[:, :H])
            f = jax.nn.sigmoid(g[:, H:2 * H])
            gg = jnp.tanh(g[:, 2 * H:3 * H])
            o = jax.nn.sigmoid(g[:, 3 * H:])
            c = f * c + i * gg
            h = o * jnp.tanh(c)
            hs[t] = h
        return hs, h, c

    hs_f, hTf, cTf = run(range(T), params['wih_f'], params['whh_f'], params['b_f'])
    hs_b, hTb, cTb = run(range(T - 1, -1, -1),
                         params['wih_b'], params['whh_b'], params['b_b'])
    out = jnp.stack([jnp.concatenate([hs_f[t], hs_b[t]], axis=-1)
                     for t in range(T)], axis=1)        # [B, T, 2H]
    hn = jnp.stack([hTf, hTb], axis=0)
    cn = jnp.stack([cTf, cTb], axis=0)
    return out, (hn, cn), new_len


def make_params(key, d2, h):
    """Weights pre-transposed to [in, out]; biases are b_ih + b_hh combined."""
    ks = jax.random.split(key, 6)
    init = lambda k, shape, s=0.1: jax.random.normal(k, shape, jnp.float32) * s
    return dict(
        wih_f=init(ks[0], (d2, 4 * h)),
        whh_f=init(ks[1], (h, 4 * h)),
        b_f=init(ks[2], (1, 4 * h)),
        wih_b=init(ks[3], (d2, 4 * h)),
        whh_b=init(ks[4], (h, 4 * h)),
        b_b=init(ks[5], (1, 4 * h)),
    )


if __name__ == "__main__":
    # Small config consistent with the module: input_dim=64, hidden_dim=128
    # (=> 64 units per direction), sample_rate=2, seq_len=16 -> T=8.
    B, S, D = 2, 16, 64
    HID = 128
    H = HID >> 1
    SR = 2

    key = jax.random.PRNGKey(0)
    kx, kp = jax.random.split(key, 2)
    x = jax.random.normal(kx, (B, S, D), jnp.float32)
    state_len = jnp.array([16, 13], dtype=jnp.int32)
    params = make_params(kp, D * SR, H)

    out, (hn, cn), new_len = pblstm_forward_pallas(x, state_len, params, sample_rate=SR)
    jax.block_until_ready((out, hn, cn, new_len))

    ref_out, (ref_hn, ref_cn), ref_len = pblstm_forward_ref(
        x, state_len, params, sample_rate=SR)

    assert out.shape == (B, S // SR, HID)
    assert hn.shape == (2, B, H) and cn.shape == (2, B, H)
    assert np.allclose(np.asarray(out), np.asarray(ref_out), atol=1e-4, rtol=1e-4)
    assert np.allclose(np.asarray(hn), np.asarray(ref_hn), atol=1e-4, rtol=1e-4)
    assert np.allclose(np.asarray(cn), np.asarray(ref_cn), atol=1e-4, rtol=1e-4)
    assert np.array_equal(np.asarray(new_len), np.asarray(ref_len))
    print("KERNEL_OK")
</pallas_src>

<mosaic_0001>
module attributes {stable_mosaic.version = 11 : i64} {
  func.func @_pblstm_kernel(%arg0: i32, %arg1: memref<8x2x128xf32, #tpu.memory_space<vmem>>, %arg2: memref<128x512xf32, #tpu.memory_space<vmem>>, %arg3: memref<1x512xf32, #tpu.memory_space<vmem>>, %arg4: memref<64x256xf32, #tpu.memory_space<vmem>>, %arg5: memref<64x256xf32, #tpu.memory_space<vmem>>, %arg6: memref<8x2x64xf32, #tpu.memory_space<vmem>>, %arg7: memref<8x2x64xf32, #tpu.memory_space<vmem>>, %arg8: memref<2x2x64xf32, #tpu.memory_space<vmem>>, %arg9: memref<2x2x64xf32, #tpu.memory_space<vmem>>, %arg10: memref<8x2x256xf32, #tpu.memory_space<vmem>>, %arg11: memref<8x2x256xf32, #tpu.memory_space<vmem>>) attributes {dimension_semantics = [#tpu.dimension_semantics<parallel>], iteration_bounds = array<i64: 1>, scalar_prefetch = 0 : i64, scratch_operands = 2 : i64, tpu.core_type = #tpu.core_type<tc>, window_params = [{transform_indices = @transform_0, window_bounds = array<i64: 8, 2, 128>}, {pipeline_mode = #tpu.pipeline_mode<synchronous>, transform_indices = @transform_1, window_bounds = array<i64: 128, 512>}, {pipeline_mode = #tpu.pipeline_mode<synchronous>, transform_indices = @transform_2, window_bounds = array<i64: 1, 512>}, {pipeline_mode = #tpu.pipeline_mode<synchronous>, transform_indices = @transform_3, window_bounds = array<i64: 64, 256>}, {pipeline_mode = #tpu.pipeline_mode<synchronous>, transform_indices = @transform_4, window_bounds = array<i64: 64, 256>}, {transform_indices = @transform_5, window_bounds = array<i64: 8, 2, 64>}, {transform_indices = @transform_6, window_bounds = array<i64: 8, 2, 64>}, {transform_indices = @transform_7, window_bounds = array<i64: 2, 2, 64>}, {transform_indices = @transform_8, window_bounds = array<i64: 2, 2, 64>}]} {
    %c0 = arith.constant 0 : index
    %c0_0 = arith.constant 0 : index
    %c0_1 = arith.constant 0 : index
    %0 = vector.load %arg1[%c0, %c0_0, %c0_1] : memref<8x2x128xf32, #tpu.memory_space<vmem>>, vector<8x2x128xf32>
    %1 = vector.shape_cast %0 : vector<8x2x128xf32> to vector<16x128xf32>
    %c0_2 = arith.constant 0 : index
    %c0_3 = arith.constant 0 : index
    %2 = vector.load %arg2[%c0_2, %c0_3] : memref<128x512xf32, #tpu.memory_space<vmem>>, vector<128x512xf32>
    %cst = arith.constant dense<0.000000e+00> : vector<16x512xf32>
    %3 = tpu.matmul %1, %2, %cst {dimension_numbers = #tpu.dot_dimension_numbers<[1], [0], [0], [1], [0, 0, 1, 1], [], []>} : vector<16x128xf32>, vector<128x512xf32>, vector<16x512xf32> -> vector<16x512xf32>
    %c0_4 = arith.constant 0 : index
    %c0_5 = arith.constant 0 : index
    %4 = vector.load %arg3[%c0_4, %c0_5] : memref<1x512xf32, #tpu.memory_space<vmem>>, vector<1x512xf32>
    %5 = vector.broadcast %4 : vector<1x512xf32> to vector<16x512xf32>
    %6 = arith.addf %3, %5 : vector<16x512xf32>
    %7 = vector.extract_strided_slice %6 {offsets = [0, 0], sizes = [16, 256], strides = [1, 1]} : vector<16x512xf32> to vector<16x256xf32>
    %8 = vector.shape_cast %7 : vector<16x256xf32> to vector<8x2x256xf32>
    %c0_6 = arith.constant 0 : index
    %c0_7 = arith.constant 0 : index
    %c0_8 = arith.constant 0 : index
    %9 = vector.load %arg10[%c0_6, %c0_7, %c0_8] : memref<8x2x256xf32, #tpu.memory_space<vmem>>, vector<8x2x256xf32>
    tpu.vector_store %arg10[%c0_6, %c0_7, %c0_8], %8 {strides = array<i32>} : memref<8x2x256xf32, #tpu.memory_space<vmem>>, vector<8x2x256xf32>,
    %10 = vector.extract_strided_slice %6 {offsets = [0, 256], sizes = [16, 256], strides = [1, 1]} : vector<16x512xf32> to vector<16x256xf32>
    %11 = vector.shape_cast %10 : vector<16x256xf32> to vector<8x2x256xf32>
    %c0_9 = arith.constant 0 : index
    %c0_10 = arith.constant 0 : index
    %c0_11 = arith.constant 0 : index
    %12 = vector.load %arg11[%c0_9, %c0_10, %c0_11] : memref<8x2x256xf32, #tpu.memory_space<vmem>>, vector<8x2x256xf32>
    tpu.vector_store %arg11[%c0_9, %c0_10, %c0_11], %11 {strides = array<i32>} : memref<8x2x256xf32, #tpu.memory_space<vmem>>, vector<8x2x256xf32>,
    %cst_12 = arith.constant 0.000000e+00 : f32
    %13 = vector.broadcast %cst_12 : f32 to vector<2x64xf32>
    %c0_i32 = arith.constant 0 : i32
    %c8_i32 = arith.constant 8 : i32
    %14 = arith.addi %c0_i32, %c8_i32 : i32
    %c1_i32 = arith.constant 1 : i32
    %15:4 = scf.for %arg12 = %c0_i32 to %14 step %c1_i32 iter_args(%arg13 = %13, %arg14 = %13, %arg15 = %13, %arg16 = %13) -> (vector<2x64xf32>, vector<2x64xf32>, vector<2x64xf32>, vector<2x64xf32>)  : i32 {
      %c7_i32 = arith.constant 7 : i32
      %28 = arith.subi %c7_i32, %arg12 : i32
      %29 = arith.index_cast %arg12 : i32 to index
      %c0_25 = arith.constant 0 : index
      %c0_26 = arith.constant 0 : index
      %30 = vector.load %arg10[%29, %c0_25, %c0_26] : memref<8x2x256xf32, #tpu.memory_space<vmem>>, vector<1x2x256xf32>
      %31 = vector.shape_cast %30 : vector<1x2x256xf32> to vector<2x256xf32>
      %c0_27 = arith.constant 0 : index
      %c0_28 = arith.constant 0 : index
      %32 = vector.load %arg4[%c0_27, %c0_28] : memref<64x256xf32, #tpu.memory_space<vmem>>, vector<64x256xf32>
      %cst_29 = arith.constant dense<0.000000e+00> : vector<2x256xf32>
      %33 = tpu.matmul %arg13, %32, %cst_29 {dimension_numbers = #tpu.dot_dimension_numbers<[1], [0], [0], [1], [0, 0, 1, 1], [], []>} : vector<2x64xf32>, vector<64x256xf32>, vector<2x256xf32> -> vector<2x256xf32>
      %34 = arith.addf %31, %33 : vector<2x256xf32>
      %35 = vector.extract_strided_slice %34 {offsets = [0, 0], sizes = [2, 64], strides = [1, 1]} : vector<2x256xf32> to vector<2x64xf32>
      %36 = arith.negf %35 : vector<2x64xf32>
      %37 = math.exp %36 : vector<2x64xf32>
      %cst_30 = arith.constant 1.000000e+00 : f32
      %38 = vector.broadcast %cst_30 : f32 to vector<2x64xf32>
      %39 = arith.addf %38, %37 : vector<2x64xf32>
      %40 = arith.divf %38, %39 : vector<2x64xf32>
      %41 = vector.extract_strided_slice %34 {offsets = [0, 64], sizes = [2, 64], strides = [1, 1]} : vector<2x256xf32> to vector<2x64xf32>
      %42 = arith.negf %41 : vector<2x64xf32>
      %43 = math.exp %42 : vector<2x64xf32>
      %cst_31 = arith.constant 1.000000e+00 : f32
      %44 = vector.broadcast %cst_31 : f32 to vector<2x64xf32>
      %45 = arith.addf %44, %43 : vector<2x64xf32>
      %46 = arith.divf %44, %45 : vector<2x64xf32>
      %47 = vector.extract_strided_slice %34 {offsets = [0, 128], sizes = [2, 64], strides = [1, 1]} : vector<2x256xf32> to vector<2x64xf32>
      %48 = math.tanh %47 : vector<2x64xf32>
      %49 = vector.extract_strided_slice %34 {offsets = [0, 192], sizes = [2, 64], strides = [1, 1]} : vector<2x256xf32> to vector<2x64xf32>
      %50 = arith.negf %49 : vector<2x64xf32>
      %51 = math.exp %50 : vector<2x64xf32>
      %cst_32 = arith.constant 1.000000e+00 : f32
      %52 = vector.broadcast %cst_32 : f32 to vector<2x64xf32>
      %53 = arith.addf %52, %51 : vector<2x64xf32>
      %54 = arith.divf %52, %53 : vector<2x64xf32>
      %55 = arith.mulf %46, %arg14 : vector<2x64xf32>
      %56 = arith.mulf %40, %48 : vector<2x64xf32>
      %57 = arith.addf %55, %56 : vector<2x64xf32>
      %58 = math.tanh %57 : vector<2x64xf32>
      %59 = arith.mulf %54, %58 : vector<2x64xf32>
      %60 = arith.index_cast %28 : i32 to index
      %c0_33 = arith.constant 0 : index
      %c0_34 = arith.constant 0 : index
      %61 = vector.load %arg11[%60, %c0_33, %c0_34] : memref<8x2x256xf32, #tpu.memory_space<vmem>>, vector<1x2x256xf32>
      %62 = vector.shape_cast %61 : vector<1x2x256xf32> to vector<2x256xf32>
      %c0_35 = arith.constant 0 : index
      %c0_36 = arith.constant 0 : index
      %63 = vector.load %arg5[%c0_35, %c0_36] : memref<64x256xf32, #tpu.memory_space<vmem>>, vector<64x256xf32>
      %cst_37 = arith.constant dense<0.000000e+00> : vector<2x256xf32>
      %64 = tpu.matmul %arg15, %63, %cst_37 {dimension_numbers = #tpu.dot_dimension_numbers<[1], [0], [0], [1], [0, 0, 1, 1], [], []>} : vector<2x64xf32>, vector<64x256xf32>, vector<2x256xf32> -> vector<2x256xf32>
      %65 = arith.addf %62, %64 : vector<2x256xf32>
      %66 = vector.extract_strided_slice %65 {offsets = [0, 0], sizes = [2, 64], strides = [1, 1]} : vector<2x256xf32> to vector<2x64xf32>
      %67 = arith.negf %66 : vector<2x64xf32>
      %68 = math.exp %67 : vector<2x64xf32>
      %cst_38 = arith.constant 1.000000e+00 : f32
      %69 = vector.broadcast %cst_38 : f32 to vector<2x64xf32>
      %70 = arith.addf %69, %68 : vector<2x64xf32>
      %71 = arith.divf %69, %70 : vector<2x64xf32>
      %72 = vector.extract_strided_slice %65 {offsets = [0, 64], sizes = [2, 64], strides = [1, 1]} : vector<2x256xf32> to vector<2x64xf32>
      %73 = arith.negf %72 : vector<2x64xf32>
      %74 = math.exp %73 : vector<2x64xf32>
      %cst_39 = arith.constant 1.000000e+00 : f32
      %75 = vector.broadcast %cst_39 : f32 to vector<2x64xf32>
      %76 = arith.addf %75, %74 : vector<2x64xf32>
      %77 = arith.divf %75, %76 : vector<2x64xf32>
      %78 = vector.extract_strided_slice %65 {offsets = [0, 128], sizes = [2, 64], strides = [1, 1]} : vector<2x256xf32> to vector<2x64xf32>
      %79 = math.tanh %78 : vector<2x64xf32>
      %80 = vector.extract_strided_slice %65 {offsets = [0, 192], sizes = [2, 64], strides = [1, 1]} : vector<2x256xf32> to vector<2x64xf32>
      %81 = arith.negf %80 : vector<2x64xf32>
      %82 = math.exp %81 : vector<2x64xf32>
      %cst_40 = arith.constant 1.000000e+00 : f32
      %83 = vector.broadcast %cst_40 : f32 to vector<2x64xf32>
      %84 = arith.addf %83, %82 : vector<2x64xf32>
      %85 = arith.divf %83, %84 : vector<2x64xf32>
      %86 = arith.mulf %77, %arg16 : vector<2x64xf32>
      %87 = arith.mulf %71, %79 : vector<2x64xf32>
      %88 = arith.addf %86, %87 : vector<2x64xf32>
      %89 = math.tanh %88 : vector<2x64xf32>
      %90 = arith.mulf %85, %89 : vector<2x64xf32>
      %91 = arith.index_cast %arg12 : i32 to index
      %c0_41 = arith.constant 0 : index
      %c0_42 = arith.constant 0 : index
      %92 = vector.load %arg6[%91, %c0_41, %c0_42] : memref<8x2x64xf32, #tpu.memory_space<vmem>>, vector<1x2x64xf32>
      %93 = vector.shape_cast %92 : vector<1x2x64xf32> to vector<2x64xf32>
      %94 = vector.shape_cast %59 : vector<2x64xf32> to vector<1x2x64xf32>
      tpu.vector_store %arg6[%91, %c0_41, %c0_42], %94 {strides = array<i32>} : memref<8x2x64xf32, #tpu.memory_space<vmem>>, vector<1x2x64xf32>,
      %95 = arith.index_cast %28 : i32 to index
      %c0_43 = arith.constant 0 : index
      %c0_44 = arith.constant 0 : index
      %96 = vector.load %arg7[%95, %c0_43, %c0_44] : memref<8x2x64xf32, #tpu.memory_space<vmem>>, vector<1x2x64xf32>
      %97 = vector.shape_cast %96 : vector<1x2x64xf32> to vector<2x64xf32>
      %98 = vector.shape_cast %90 : vector<2x64xf32> to vector<1x2x64xf32>
      tpu.vector_store %arg7[%95, %c0_43, %c0_44], %98 {strides = array<i32>} : memref<8x2x64xf32, #tpu.memory_space<vmem>>, vector<1x2x64xf32>,
      scf.yield %59, %57, %90, %88 : vector<2x64xf32>, vector<2x64xf32>, vector<2x64xf32>, vector<2x64xf32>
    }
    %c8_i32_13 = arith.constant 8 : i32
    %c0_14 = arith.constant 0 : index
    %c0_15 = arith.constant 0 : index
    %c0_16 = arith.constant 0 : index
    %16 = vector.load %arg8[%c0_14, %c0_15, %c0_16] : memref<2x2x64xf32, #tpu.memory_space<vmem>>, vector<1x2x64xf32>
    %17 = vector.shape_cast %16 : vector<1x2x64xf32> to vector<2x64xf32>
    %18 = vector.shape_cast %15#0 : vector<2x64xf32> to vector<1x2x64xf32>
    tpu.vector_store %arg8[%c0_14, %c0_15, %c0_16], %18 {strides = array<i32>} : memref<2x2x64xf32, #tpu.memory_space<vmem>>, vector<1x2x64xf32>,
    %c1 = arith.constant 1 : index
    %c0_17 = arith.constant 0 : index
    %c0_18 = arith.constant 0 : index
    %19 = vector.load %arg8[%c1, %c0_17, %c0_18] : memref<2x2x64xf32, #tpu.memory_space<vmem>>, vector<1x2x64xf32>
    %20 = vector.shape_cast %19 : vector<1x2x64xf32> to vector<2x64xf32>
    %21 = vector.shape_cast %15#2 : vector<2x64xf32> to vector<1x2x64xf32>
    tpu.vector_store %arg8[%c1, %c0_17, %c0_18], %21 {strides = array<i32>} : memref<2x2x64xf32, #tpu.memory_space<vmem>>, vector<1x2x64xf32>,
    %c0_19 = arith.constant 0 : index
    %c0_20 = arith.constant 0 : index
    %c0_21 = arith.constant 0 : index
    %22 = vector.load %arg9[%c0_19, %c0_20, %c0_21] : memref<2x2x64xf32, #tpu.memory_space<vmem>>, vector<1x2x64xf32>
    %23 = vector.shape_cast %22 : vector<1x2x64xf32> to vector<2x64xf32>
    %24 = vector.shape_cast %15#1 : vector<2x64xf32> to vector<1x2x64xf32>
    tpu.vector_store %arg9[%c0_19, %c0_20, %c0_21], %24 {strides = array<i32>} : memref<2x2x64xf32, #tpu.memory_space<vmem>>, vector<1x2x64xf32>,
    %c1_22 = arith.constant 1 : index
    %c0_23 = arith.constant 0 : index
    %c0_24 = arith.constant 0 : index
    %25 = vector.load %arg9[%c1_22, %c0_23, %c0_24] : memref<2x2x64xf32, #tpu.memory_space<vmem>>, vector<1x2x64xf32>
    %26 = vector.shape_cast %25 : vector<1x2x64xf32> to vector<2x64xf32>
    %27 = vector.shape_cast %15#3 : vector<2x64xf32> to vector<1x2x64xf32>
    tpu.vector_store %arg9[%c1_22, %c0_23, %c0_24], %27 {strides = array<i32>} : memref<2x2x64xf32, #tpu.memory_space<vmem>>, vector<1x2x64xf32>,
    return
  }
  func.func @transform_0(%arg0: i32) -> (i32, i32, i32) {
    %c0_i32 = arith.constant 0 : i32
    %c0_i32_0 = arith.constant 0 : i32
    %c0_i32_1 = arith.constant 0 : i32
    return %c0_i32, %arg0, %c0_i32_0 : i32, i32, i32
  }
  func.func @transform_1(%arg0: i32) -> (i32, i32) {
    %c0_i32 = arith.constant 0 : i32
    %c0_i32_0 = arith.constant 0 : i32
    %c0_i32_1 = arith.constant 0 : i32
    return %c0_i32, %c0_i32_0 : i32, i32
  }
  func.func @transform_2(%arg0: i32) -> (i32, i32) {
    %c0_i32 = arith.constant 0 : i32
    %c0_i32_0 = arith.constant 0 : i32
    %c0_i32_1 = arith.constant 0 : i32
    return %c0_i32, %c0_i32_0 : i32, i32
  }
  func.func @transform_3(%arg0: i32) -> (i32, i32) {
    %c0_i32 = arith.constant 0 : i32
    %c0_i32_0 = arith.constant 0 : i32
    %c0_i32_1 = arith.constant 0 : i32
    return %c0_i32, %c0_i32_0 : i32, i32
  }
  func.func @transform_4(%arg0: i32) -> (i32, i32) {
    %c0_i32 = arith.constant 0 : i32
    %c0_i32_0 = arith.constant 0 : i32
    %c0_i32_1 = arith.constant 0 : i32
    return %c0_i32, %c0_i32_0 : i32, i32
  }
  func.func @transform_5(%arg0: i32) -> (i32, i32, i32) {
    %c0_i32 = arith.constant 0 : i32
    %c0_i32_0 = arith.constant 0 : i32
    %c0_i32_1 = arith.constant 0 : i32
    return %c0_i32, %arg0, %c0_i32_0 : i32, i32, i32
  }
  func.func @transform_6(%arg0: i32) -> (i32, i32, i32) {
    %c0_i32 = arith.constant 0 : i32
    %c0_i32_0 = arith.constant 0 : i32
    %c0_i32_1 = arith.constant 0 : i32
    return %c0_i32, %arg0, %c0_i32_0 : i32, i32, i32
  }
  func.func @transform_7(%arg0: i32) -> (i32, i32, i32) {
    %c0_i32 = arith.constant 0 : i32
    %c0_i32_0 = arith.constant 0 : i32
    %c0_i32_1 = arith.constant 0 : i32
    return %c0_i32, %arg0, %c0_i32_0 : i32, i32, i32
  }
  func.func @transform_8(%arg0: i32) -> (i32, i32, i32) {
    %c0_i32 = arith.constant 0 : i32
    %c0_i32_0 = arith.constant 0 : i32
    %c0_i32_1 = arith.constant 0 : i32
    return %c0_i32, %arg0, %c0_i32_0 : i32, i32, i32
  }
}

</mosaic_0001>

<llo_original>
// kernel: tpu_custom_call.1
$region0: #{tpu_custom_call.1}
  #allocation0 [shape = 'u32[]', space=smem, size = 0x4, offset = 0x4, fixed_abs, tag = 'smem constant byte address 0x4 - core index']
  #allocation1 [shape = 'u32[144,128]{1,0:T(1,128)}', space=vmem, size = 0x12000, scoped, tag = 'internal scratch']
  #allocation2 [shape = 'f32[8,2,256]{2,1,0:T(2,128)}', space=vmem, size = 0x4000, scoped, tag = 'scratch operand']
  #allocation3 [shape = 'f32[8,2,256]{2,1,0:T(2,128)}', space=vmem, size = 0x4000, scoped, tag = 'scratch operand']
  %s0 = inlined_call_operand.hbm [shape: f32[8,2,128], index: 0, kind: input, shape index: {}]
  %s1 = inlined_call_operand.hbm [shape: f32[128,512], index: 1, kind: input, shape index: {}]
  %s2 = inlined_call_operand.hbm [shape: f32[1,512], index: 2, kind: input, shape index: {}]
  %s3 = inlined_call_operand.hbm [shape: f32[64,256], index: 3, kind: input, shape index: {}]
  %s4 = inlined_call_operand.hbm [shape: f32[64,256], index: 4, kind: input, shape index: {}]
  %s5 = inlined_call_operand.hbm [shape: f32[8,2,64], index: 5, kind: output, shape index: {0}]
  %s6 = inlined_call_operand.hbm [shape: f32[8,2,64], index: 6, kind: output, shape index: {1}]
  %s7 = inlined_call_operand.hbm [shape: f32[2,2,64], index: 7, kind: output, shape index: {2}]
  %s8 = inlined_call_operand.hbm [shape: f32[2,2,64], index: 8, kind: output, shape index: {3}]
  %9 = xla_tuple %s5, %s6, %s7, %s8
  %s10 = sld [smem:[#allocation0]]
  $region81: #{tpu_custom_call.1} parent=0
    _
  %s12 = ssub.s32 1, %s10
  %s13 = scalar_select 0, %s12, %s10
  $region1: #{tpu_custom_call.1} parent=0
    #allocation4 [shape = 'u8[8192]{0}', space=vmem, size = 0x2000, scoped, tag = 'input window, operand 0, single buffered']
    #allocation5 [shape = 's32[1]{0}', space=sflag, size = 0x4, scoped, tag = 'scoped memory for tpu_custom_call.1']
    #allocation6 [shape = 's32[1]{0}', space=sflag, size = 0x4, scoped, tag = 'scoped memory for tpu_custom_call.1']
    #allocation7 [shape = 'u8[262144]{0}', space=vmem, size = 0x40000, scoped, tag = 'input window, operand 1, single buffered']
    #allocation8 [shape = 's32[1]{0}', space=sflag, size = 0x4, scoped, tag = 'scoped memory for tpu_custom_call.1']
    #allocation9 [shape = 'u8[2048]{0}', space=vmem, size = 0x800, scoped, tag = 'input window, operand 2, single buffered']
    #allocation10 [shape = 'u8[65536]{0}', space=vmem, size = 0x10000, scoped, tag = 'input window, operand 3, single buffered']
    #allocation11 [shape = 's32[1]{0}', space=sflag, size = 0x4, scoped, tag = 'scoped memory for tpu_custom_call.1']
    #allocation12 [shape = 'u8[65536]{0}', space=vmem, size = 0x10000, scoped, tag = 'input window, operand 4, single buffered']
    #allocation13 [shape = 'u8[8192]{0}', space=vmem, size = 0x2000, scoped, tag = 'output window, operand 0, single buffered']
    #allocation14 [shape = 'u8[8192]{0}', space=vmem, size = 0x2000, scoped, tag = 'output window, operand 1, single buffered']
    #allocation15 [shape = 's32[1]{0}', space=sflag, size = 0x4, scoped, tag = 'scoped memory for tpu_custom_call.1']
    #allocation16 [shape = 'u8[2048]{0}', space=vmem, size = 0x800, scoped, tag = 'output window, operand 2, single buffered']
    #allocation17 [shape = 'u8[2048]{0}', space=vmem, size = 0x800, scoped, tag = 'output window, operand 3, single buffered']
    #allocation18 [shape = 's32[1]{0}', space=sflag, size = 0x4, scoped, tag = 'scoped memory for tpu_custom_call.1']
    %14 = vsyncpa [#allocation5], 0
    %15 = vsyncpa [#allocation8], 0
    %16 = vsyncpa [#allocation11], 0
    %17 = vsyncpa [#allocation6], 0
    %18 = vsyncpa [#allocation15], 0
    %19 = vsyncpa [#allocation18], 0
    // Predicated region
    $region2: #{tpu_custom_call.1} parent=1 // pred_check
      _
    $region3: #{tpu_custom_call.1} parent=1 // pred_check_branch
      %21 = sbr.rel (0) target = $region5
    $region4: #{tpu_custom_call.1} parent=1 // pred_region
      %s23 = ssub.s32 256, 256
      %24 = vsyncadd [#allocation5], %s23
      %s25 = sshll.u32 [#allocation4], 4
      %s26 = int_to_ptr.vmem [resolvable:$true] %s25
      %31 = dma.hbm_to_vmem [thread:$0]  %s0, 256, %s26, [#allocation5], 32, 32, 2
    $region5: #{tpu_custom_call.1} parent=1 // pred_fallthru
      _
    // Predicated region
    $region6: #{tpu_custom_call.1} parent=1 // pred_check
      _
    $region7: #{tpu_custom_call.1} parent=1 // pred_check_branch
      %33 = sbr.rel (0) target = $region9
    $region8: #{tpu_custom_call.1} parent=1 // pred_region
      %s35 = ssub.s32 8192, 8192
      %36 = vsyncadd [#allocation8], %s35
      %s37 = sshll.u32 [#allocation7], 4
      %s38 = int_to_ptr.vmem [resolvable:$true] %s37
      %43 = dma.hbm_to_vmem [thread:$0]  %s1, 8192, %s38, [#allocation8], 512, 512, 32
    $region9: #{tpu_custom_call.1} parent=1 // pred_fallthru
      _
    // Predicated region
    $region10: #{tpu_custom_call.1} parent=1 // pred_check
      _
    $region11: #{tpu_custom_call.1} parent=1 // pred_check_branch
      %45 = sbr.rel (0) target = $region13
    $region12: #{tpu_custom_call.1} parent=1 // pred_region
      %s47 = ssub.s32 64, 64
      %48 = vsyncadd [#allocation8], %s47
      %s50 = sshll.u32 [#allocation9], 4
      %s51 = int_to_ptr.vmem [resolvable:$true] %s50
      %53 = dma.hbm_to_vmem [thread:$0]  %s2, 64, %s51, [#allocation8]
    $region13: #{tpu_custom_call.1} parent=1 // pred_fallthru
      _
    // Predicated region
    $region14: #{tpu_custom_call.1} parent=1 // pred_check
      _
    $region15: #{tpu_custom_call.1} parent=1 // pred_check_branch
      %55 = sbr.rel (0) target = $region17
    $region16: #{tpu_custom_call.1} parent=1 // pred_region
      %s57 = ssub.s32 2048, 2048
      %58 = vsyncadd [#allocation11], %s57
      %s59 = sshll.u32 [#allocation10], 4
      %s60 = int_to_ptr.vmem [resolvable:$true] %s59
      %65 = dma.hbm_to_vmem [thread:$0]  %s3, 2048, %s60, [#allocation11], 256, 256, 16
    $region17: #{tpu_custom_call.1} parent=1 // pred_fallthru
      _
    // Predicated region
    $region18: #{tpu_custom_call.1} parent=1 // pred_check
      _
    $region19: #{tpu_custom_call.1} parent=1 // pred_check_branch
      %67 = sbr.rel (0) target = $region21
    $region20: #{tpu_custom_call.1} parent=1 // pred_region
      %s69 = ssub.s32 2048, 2048
      %70 = vsyncadd [#allocation11], %s69
      %s71 = sshll.u32 [#allocation12], 4
      %s72 = int_to_ptr.vmem [resolvable:$true] %s71
      %77 = dma.hbm_to_vmem [thread:$0]  %s4, 2048, %s72, [#allocation11], 256, 256, 16
    $region21: #{tpu_custom_call.1} parent=1 // pred_fallthru
      _
    // Predicated region
    $region22: #{tpu_custom_call.1} parent=1 // pred_check
      _
    $region23: #{tpu_custom_call.1} parent=1 // pred_check_branch
      %79 = sbr.rel (0) target = $region25
    $region24: #{tpu_custom_call.1} parent=1 // pred_region
      %80 = dma.done [#allocation5], 256
    $region25: #{tpu_custom_call.1} parent=1 // pred_fallthru
      _
    // Predicated region
    $region26: #{tpu_custom_call.1} parent=1 // pred_check
      _
    $region27: #{tpu_custom_call.1} parent=1 // pred_check_branch
      %82 = sbr.rel (0) target = $region29
    $region28: #{tpu_custom_call.1} parent=1 // pred_region
      %83 = dma.done [#allocation8], 8192
    $region29: #{tpu_custom_call.1} parent=1 // pred_fallthru
      _
    // Predicated region
    $region30: #{tpu_custom_call.1} parent=1 // pred_check
      _
    $region31: #{tpu_custom_call.1} parent=1 // pred_check_branch
      %85 = sbr.rel (0) target = $region33
    $region32: #{tpu_custom_call.1} parent=1 // pred_region
      %86 = dma.done [#allocation8], 64
    $region33: #{tpu_custom_call.1} parent=1 // pred_fallthru
      _
    // Predicated region
    $region34: #{tpu_custom_call.1} parent=1 // pred_check
      _
    $region35: #{tpu_custom_call.1} parent=1 // pred_check_branch
      %88 = sbr.rel (0) target = $region37
    $region36: #{tpu_custom_call.1} parent=1 // pred_region
      %89 = dma.done [#allocation11], 2048
    $region37: #{tpu_custom_call.1} parent=1 // pred_fallthru
      _
    // Predicated region
    $region38: #{tpu_custom_call.1} parent=1 // pred_check
      _
    $region39: #{tpu_custom_call.1} parent=1 // pred_check_branch
      %91 = sbr.rel (0) target = $region41
    $region40: #{tpu_custom_call.1} parent=1 // pred_region
      %92 = dma.done [#allocation11], 2048
    $region41: #{tpu_custom_call.1} parent=1 // pred_fallthru
      _
    %v93 = vld [vmem:[#allocation4] sm:$0x3]
    %v94 = vld [vmem:[#allocation4 + $0x2] sm:$0x3]
    %v95 = vld [vmem:[#allocation4 + $0x4] sm:$0x3]
    %v96 = vld [vmem:[#allocation4 + $0x6] sm:$0x3]
    %v97 = vld [vmem:[#allocation4 + $0x8] sm:$0x3]
    %v98 = vld [vmem:[#allocation4 + $0xa] sm:$0x3]
    %v99 = vld [vmem:[#allocation4 + $0xc] sm:$0x3]
    %v100 = vld [vmem:[#allocation4 + $0xe] sm:$0x3]
    %v101 = vld [vmem:[#allocation7] sm:$0xff]
    %v102 = vld [vmem:[#allocation7 + $0x8] sm:$0xff]
    %v103 = vld [vmem:[#allocation7 + $0x10] sm:$0xff]
    %v104 = vld [vmem:[#allocation7 + $0x18] sm:$0xff]
    %v105 = vld [vmem:[#allocation7 + $0x20] sm:$0xff]
    %v106 = vld [vmem:[#allocation7 + $0x28] sm:$0xff]
    %v107 = vld [vmem:[#allocation7 + $0x30] sm:$0xff]
    %v108 = vld [vmem:[#allocation7 + $0x38] sm:$0xff]
    %v109 = vld [vmem:[#allocation7 + $0x40] sm:$0xff]
    %v110 = vld [vmem:[#allocation7 + $0x48] sm:$0xff]
    %v111 = vld [vmem:[#allocation7 + $0x50] sm:$0xff]
    %v112 = vld [vmem:[#allocation7 + $0x58] sm:$0xff]
    %v113 = vld [vmem:[#allocation7 + $0x60] sm:$0xff]
    %v114 = vld [vmem:[#allocation7 + $0x68] sm:$0xff]
    %v115 = vld [vmem:[#allocation7 + $0x70] sm:$0xff]
    %v116 = vld [vmem:[#allocation7 + $0x78] sm:$0xff]
    %v117 = vld [vmem:[#allocation7 + $0x80] sm:$0xff]
    %v118 = vld [vmem:[#allocation7 + $0x88] sm:$0xff]
    %v119 = vld [vmem:[#allocation7 + $0x90] sm:$0xff]
    %v120 = vld [vmem:[#allocation7 + $0x98] sm:$0xff]
    %v121 = vld [vmem:[#allocation7 + $0xa0] sm:$0xff]
    %v122 = vld [vmem:[#allocation7 + $0xa8] sm:$0xff]
    %v123 = vld [vmem:[#allocation7 + $0xb0] sm:$0xff]
    %v124 = vld [vmem:[#allocation7 + $0xb8] sm:$0xff]
    %v125 = vld [vmem:[#allocation7 + $0xc0] sm:$0xff]
    %v126 = vld [vmem:[#allocation7 + $0xc8] sm:$0xff]
    %v127 = vld [vmem:[#allocation7 + $0xd0] sm:$0xff]
    %v128 = vld [vmem:[#allocation7 + $0xd8] sm:$0xff]
    %v129 = vld [vmem:[#allocation7 + $0xe0] sm:$0xff]
    %v130 = vld [vmem:[#allocation7 + $0xe8] sm:$0xff]
    %v131 = vld [vmem:[#allocation7 + $0xf0] sm:$0xff]
    %v132 = vld [vmem:[#allocation7 + $0xf8] sm:$0xff]
    %v133 = vld [vmem:[#allocation7 + $0x100] sm:$0xff]
    %v134 = vld [vmem:[#allocation7 + $0x108] sm:$0xff]
    %v135 = vld [vmem:[#allocation7 + $0x110] sm:$0xff]
    %v136 = vld [vmem:[#allocation7 + $0x118] sm:$0xff]
    %v137 = vld [vmem:[#allocation7 + $0x120] sm:$0xff]
    %v138 = vld [vmem:[#allocation7 + $0x128] sm:$0xff]
    %v139 = vld [vmem:[#allocation7 + $0x130] sm:$0xff]
    %v140 = vld [vmem:[#allocation7 + $0x138] sm:$0xff]
    %v141 = vld [vmem:[#allocation7 + $0x140] sm:$0xff]
    %v142 = vld [vmem:[#allocation7 + $0x148] sm:$0xff]
    %v143 = vld [vmem:[#allocation7 + $0x150] sm:$0xff]
    %v144 = vld [vmem:[#allocation7 + $0x158] sm:$0xff]
    %v145 = vld [vmem:[#allocation7 + $0x160] sm:$0xff]
    %v146 = vld [vmem:[#allocation7 + $0x168] sm:$0xff]
    %v147 = vld [vmem:[#allocation7 + $0x170] sm:$0xff]
    %v148 = vld [vmem:[#allocation7 + $0x178] sm:$0xff]
    %v149 = vld [vmem:[#allocation7 + $0x180] sm:$0xff]
    %v150 = vld [vmem:[#allocation7 + $0x188] sm:$0xff]
    %v151 = vld [vmem:[#allocation7 + $0x190] sm:$0xff]
    %v152 = vld [vmem:[#allocation7 + $0x198] sm:$0xff]
    %v153 = vld [vmem:[#allocation7 + $0x1a0] sm:$0xff]
    %v154 = vld [vmem:[#allocation7 + $0x1a8] sm:$0xff]
    %v155 = vld [vmem:[#allocation7 + $0x1b0] sm:$0xff]
    %v156 = vld [vmem:[#allocation7 + $0x1b8] sm:$0xff]
    %v157 = vld [vmem:[#allocation7 + $0x1c0] sm:$0xff]
    %v158 = vld [vmem:[#allocation7 + $0x1c8] sm:$0xff]
    %v159 = vld [vmem:[#allocation7 + $0x1d0] sm:$0xff]
    %v160 = vld [vmem:[#allocation7 + $0x1d8] sm:$0xff]
    %v161 = vld [vmem:[#allocation7 + $0x1e0] sm:$0xff]
    %v162 = vld [vmem:[#allocation7 + $0x1e8] sm:$0xff]
    %v163 = vld [vmem:[#allocation7 + $0x1f0] sm:$0xff]
    %v164 = vld [vmem:[#allocation7 + $0x1f8] sm:$0xff]
    %v165 = vld [vmem:[#allocation9] sm:$0xf]
    %v167 = vlaneseq
    %v168 = vshrl.u32 %v167, 7
    %v169 = vsub.s32 0, %v168
    %v170 = vrot.slane %v165, %v169
    %v171 = vlaneseq
    %v172 = vshrl.u32 %v171, 7
    %v173 = vsub.s32 1, %v172
    %v174 = vrot.slane %v165, %v173
    %v175 = vlaneseq
    %v176 = vshrl.u32 %v175, 7
    %v177 = vsub.s32 2, %v176
    %v178 = vrot.slane %v165, %v177
    %v179 = vlaneseq
    %v180 = vshrl.u32 %v179, 7
    %v181 = vsub.s32 3, %v180
    %v182 = vrot.slane %v165, %v181
    %v195 = vcombine.low %v93, %v94
    %v196 = vcombine.low %v95, %v96
    %v198 = vunpack.c.l.s4 1983009808
    %v199 = vunpack.c.0.s8 %v198
    %v200 = vlaneseq
    %v201 = vshrl.u32 %v200, 7
    %v202 = vsub.s32 %v199, %v201
    %v203 = vrot.slane %v195, %v202
    %v205 = vunpack.c.l.s4 1983009808
    %v206 = vunpack.c.0.s8 %v205
    %v207 = vlaneseq
    %v208 = vshrl.u32 %v207, 7
    %v209 = vsub.s32 %v206, %v208
    %v210 = vrot.slane %v196, %v209
    %v211 = vcombine.low %v203, %v210
    %v212 = vcombine.low %v97, %v98
    %v213 = vcombine.low %v99, %v100
    %v215 = vunpack.c.l.s4 1983009808
    %v216 = vunpack.c.0.s8 %v215
    %v217 = vlaneseq
    %v218 = vshrl.u32 %v217, 7
    %v219 = vsub.s32 %v216, %v218
    %v220 = vrot.slane %v212, %v219
    %v222 = vunpack.c.l.s4 1983009808
    %v223 = vunpack.c.0.s8 %v222
    %v224 = vlaneseq
    %v225 = vshrl.u32 %v224, 7
    %v226 = vsub.s32 %v223, %v225
    %v227 = vrot.slane %v213, %v226
    %v228 = vcombine.low %v220, %v227
    %231 = vmatprep.subr.mxu0 %v162
    %232 = vmatpush1.msra.mxu0 %v161
    %233 = vmatprep.subr.mxu0 %v158
    %234 = vmatpush1.msra.mxu0 %v157
    %235 = vmatprep.subr.mxu0 %v154
    %236 = vmatpush1.msra.mxu0 %v153
    %237 = vmatprep.subr.mxu0 %v150
    %238 = vmatpush1.msra.mxu0 %v149
    %239 = vmatprep.subr.mxu0 %v146
    %240 = vmatpush1.msra.mxu0 %v145
    %241 = vmatprep.subr.mxu0 %v142
    %242 = vmatpush1.msra.mxu0 %v141
    %243 = vmatprep.subr.mxu0 %v138
    %244 = vmatpush1.msra.mxu0 %v137
    %245 = vmatprep.subr.mxu0 %v134
    %246 = vmatpush1.msra.mxu0 %v133
    %247 = vmatprep.subr.mxu0 %v130
    %248 = vmatpush1.msra.mxu0 %v129
    %249 = vmatprep.subr.mxu0 %v126
    %250 = vmatpush1.msra.mxu0 %v125
    %251 = vmatprep.subr.mxu0 %v122
    %252 = vmatpush1.msra.mxu0 %v121
    %253 = vmatprep.subr.mxu0 %v118
    %254 = vmatpush1.msra.mxu0 %v117
    %255 = vmatprep.subr.mxu0 %v114
    %256 = vmatpush1.msra.mxu0 %v113
    %257 = vmatprep.subr.mxu0 %v110
    %258 = vmatpush1.msra.mxu0 %v109
    %259 = vmatprep.subr.mxu0 %v106
    %260 = vmatpush1.msra.mxu0 %v105
    %261 = vmatprep.subr.mxu0 %v102
    %262 = vmatpush1.msra.mxu0 %v101
    %263 = vmatprep.subr.mxu0 0.0
    %264 = vmatpush2.msra.mxu0 0.0
    %265 = vmatprep.subr.mxu0 0.0
    %266 = vmatpush2.msra.mxu0 0.0
    %267 = vmatprep.subr.mxu0 0.0
    %268 = vmatpush2.msra.mxu0 0.0
    %269 = vmatprep.subr.mxu0 0.0
    %270 = vmatpush2.msra.mxu0 0.0
    %271 = vmatprep.subr.mxu0 0.0
    %272 = vmatpush2.msra.mxu0 0.0
    %273 = vmatprep.subr.mxu0 0.0
    %274 = vmatpush2.msra.mxu0 0.0
    %275 = vmatprep.subr.mxu0 0.0
    %276 = vmatpush2.msra.mxu0 0.0
    %277 = vmatprep.subr.mxu0 0.0
    %278 = vmatpush2.msra.mxu0 0.0
    %279 = vmatprep.subr.mxu0 0.0
    %280 = vmatpush2.msra.mxu0 0.0
    %281 = vmatprep.subr.mxu0 0.0
    %282 = vmatpush2.msra.mxu0 0.0
    %283 = vmatprep.subr.mxu0 0.0
    %284 = vmatpush2.msra.mxu0 0.0
    %285 = vmatprep.subr.mxu0 0.0
    %286 = vmatpush2.msra.mxu0 0.0
    %287 = vmatprep.subr.mxu0 0.0
    %288 = vmatpush2.msra.mxu0 0.0
    %289 = vmatprep.subr.mxu0 0.0
    %290 = vmatpush2.msra.mxu0 0.0
    %291 = vmatprep.subr.mxu0 0.0
    %292 = vmatpush2.msra.mxu0 0.0
    %293 = vmatprep.subr.mxu0 0.0
    %294 = vmatpush2.msra.mxu0 0.0
    %295 = vmatprep.mubr.f32.mxu0 0.0
    %296 = vmatmul.mubr.f32.gmra.mxu0 %v211
    %v297 = vpop.f32.mrf.mxu0
    %v298 = vadd.f32 %v170, %v297
    %v299 = vpop.f32.mrf.mxu0
    %v300 = vadd.f32 %v174, %v299
    %301 = vmatprep.mubr.f32.mxu0 0.0
    %302 = vmatmul.mubr.f32.gmra.mxu0 %v228
    %v303 = vpop.f32.mrf.mxu0
    %v304 = vadd.f32 %v170, %v303
    %v305 = vpop.f32.mrf.mxu0
    %v306 = vadd.f32 %v174, %v305
    %307 = vdwg.mxu0
    %308 = vmatprep.subr.mxu0 %v164
    %309 = vmatpush1.msra.mxu0 %v163
    %310 = vmatprep.subr.mxu0 %v160
    %311 = vmatpush1.msra.mxu0 %v159
    %312 = vmatprep.subr.mxu0 %v156
    %313 = vmatpush1.msra.mxu0 %v155
    %314 = vmatprep.subr.mxu0 %v152
    %315 = vmatpush1.msra.mxu0 %v151
    %316 = vmatprep.subr.mxu0 %v148
    %317 = vmatpush1.msra.mxu0 %v147
    %318 = vmatprep.subr.mxu0 %v144
    %319 = vmatpush1.msra.mxu0 %v143
    %320 = vmatprep.subr.mxu0 %v140
    %321 = vmatpush1.msra.mxu0 %v139
    %322 = vmatprep.subr.mxu0 %v136
    %323 = vmatpush1.msra.mxu0 %v135
    %324 = vmatprep.subr.mxu0 %v132
    %325 = vmatpush1.msra.mxu0 %v131
    %326 = vmatprep.subr.mxu0 %v128
    %327 = vmatpush1.msra.mxu0 %v127
    %328 = vmatprep.subr.mxu0 %v124
    %329 = vmatpush1.msra.mxu0 %v123
    %330 = vmatprep.subr.mxu0 %v120
    %331 = vmatpush1.msra.mxu0 %v119
    %332 = vmatprep.subr.mxu0 %v116
    %333 = vmatpush1.msra.mxu0 %v115
    %334 = vmatprep.subr.mxu0 %v112
    %335 = vmatpush1.msra.mxu0 %v111
    %336 = vmatprep.subr.mxu0 %v108
    %337 = vmatpush1.msra.mxu0 %v107
    %338 = vmatprep.subr.mxu0 %v104
    %339 = vmatpush1.msra.mxu0 %v103
    %340 = vmatprep.subr.mxu0 0.0
    %341 = vmatpush2.msra.mxu0 0.0
    %342 = vmatprep.subr.mxu0 0.0
    %343 = vmatpush2.msra.mxu0 0.0
    %344 = vmatprep.subr.mxu0 0.0
    %345 = vmatpush2.msra.mxu0 0.0
    %346 = vmatprep.subr.mxu0 0.0
    %347 = vmatpush2.msra.mxu0 0.0
    %348 = vmatprep.subr.mxu0 0.0
    %349 = vmatpush2.msra.mxu0 0.0
    %350 = vmatprep.subr.mxu0 0.0
    %351 = vmatpush2.msra.mxu0 0.0
    %352 = vmatprep.subr.mxu0 0.0
    %353 = vmatpush2.msra.mxu0 0.0
    %354 = vmatprep.subr.mxu0 0.0
    %355 = vmatpush2.msra.mxu0 0.0
    %356 = vmatprep.subr.mxu0 0.0
    %357 = vmatpush2.msra.mxu0 0.0
    %358 = vmatprep.subr.mxu0 0.0
    %359 = vmatpush2.msra.mxu0 0.0
    %360 = vmatprep.subr.mxu0 0.0
    %361 = vmatpush2.msra.mxu0 0.0
    %362 = vmatprep.subr.mxu0 0.0
    %363 = vmatpush2.msra.mxu0 0.0
    %364 = vmatprep.subr.mxu0 0.0
    %365 = vmatpush2.msra.mxu0 0.0
    %366 = vmatprep.subr.mxu0 0.0
    %367 = vmatpush2.msra.mxu0 0.0
    %368 = vmatprep.subr.mxu0 0.0
    %369 = vmatpush2.msra.mxu0 0.0
    %370 = vmatprep.subr.mxu0 0.0
    %371 = vmatpush2.msra.mxu0 0.0
    %372 = vmatprep.mubr.f32.mxu0 0.0
    %373 = vmatmul.mubr.f32.gmra.mxu0 %v211
    %v374 = vpop.f32.mrf.mxu0
    %v375 = vadd.f32 %v178, %v374
    %v376 = vpop.f32.mrf.mxu0
    %v377 = vadd.f32 %v182, %v376
    %378 = vmatprep.mubr.f32.mxu0 0.0
    %379 = vmatmul.mubr.f32.gmra.mxu0 %v228
    %v380 = vpop.f32.mrf.mxu0
    %v381 = vadd.f32 %v178, %v380
    %v382 = vpop.f32.mrf.mxu0
    %v383 = vadd.f32 %v182, %v382
    %384 = vdwg.mxu0
    %v389 = vcombine.low %v298, %v300
    %v390 = vcombine.high %v298, %v300
    %v392 = vunpack.c.l.s4 1983009808
    %v393 = vunpack.c.0.s8 %v392
    %v394 = vlaneseq
    %v395 = vshrl.u32 %v394, 7
    %v396 = vsub.s32 %v393, %v395
    %v397 = vrot.slane %v389, %v396
    %v399 = vunpack.c.l.s4 1983009808
    %v400 = vunpack.c.0.s8 %v399
    %v401 = vlaneseq
    %v402 = vshrl.u32 %v401, 7
    %v403 = vsub.s32 %v400, %v402
    %v404 = vrot.slane %v390, %v403
    %v405 = vcombine.high %v397, %v397
    %v406 = vcombine.high %v404, %v404
    %v407 = vcombine.low %v304, %v306
    %v408 = vcombine.high %v304, %v306
    %v410 = vunpack.c.l.s4 1983009808
    %v411 = vunpack.c.0.s8 %v410
    %v412 = vlaneseq
    %v413 = vshrl.u32 %v412, 7
    %v414 = vsub.s32 %v411, %v413
    %v415 = vrot.slane %v407, %v414
    %v417 = vunpack.c.l.s4 1983009808
    %v418 = vunpack.c.0.s8 %v417
    %v419 = vlaneseq
    %v420 = vshrl.u32 %v419, 7
    %v421 = vsub.s32 %v418, %v420
    %v422 = vrot.slane %v408, %v421
    %v423 = vcombine.high %v415, %v415
    %v424 = vcombine.high %v422, %v422
    %433 = vst [vmem:[#allocation2] sm:$0xf] %v397
    %434 = vst [vmem:[#allocation2 + $0x4] sm:$0xf] %v405
    %435 = vst [vmem:[#allocation2 + $0x8] sm:$0xf] %v404
    %436 = vst [vmem:[#allocation2 + $0xc] sm:$0xf] %v406
    %437 = vst [vmem:[#allocation2 + $0x10] sm:$0xf] %v415
    %438 = vst [vmem:[#allocation2 + $0x14] sm:$0xf] %v423
    %439 = vst [vmem:[#allocation2 + $0x18] sm:$0xf] %v422
    %440 = vst [vmem:[#allocation2 + $0x1c] sm:$0xf] %v424
    %v445 = vcombine.low %v375, %v377
    %v446 = vcombine.high %v375, %v377
    %v448 = vunpack.c.l.s4 1983009808
    %v449 = vunpack.c.0.s8 %v448
    %v450 = vlaneseq
    %v451 = vshrl.u32 %v450, 7
    %v452 = vsub.s32 %v449, %v451
    %v453 = vrot.slane %v445, %v452
    %v455 = vunpack.c.l.s4 1983009808
    %v456 = vunpack.c.0.s8 %v455
    %v457 = vlaneseq
    %v458 = vshrl.u32 %v457, 7
    %v459 = vsub.s32 %v456, %v458
    %v460 = vrot.slane %v446, %v459
    %v461 = vcombine.high %v453, %v453
    %v462 = vcombine.high %v460, %v460
    %v463 = vcombine.low %v381, %v383
    %v464 = vcombine.high %v381, %v383
    %v466 = vunpack.c.l.s4 1983009808
    %v467 = vunpack.c.0.s8 %v466
    %v468 = vlaneseq
    %v469 = vshrl.u32 %v468, 7
    %v470 = vsub.s32 %v467, %v469
    %v471 = vrot.slane %v463, %v470
    %v473 = vunpack.c.l.s4 1983009808
    %v474 = vunpack.c.0.s8 %v473
    %v475 = vlaneseq
    %v476 = vshrl.u32 %v475, 7
    %v477 = vsub.s32 %v474, %v476
    %v478 = vrot.slane %v464, %v477
    %v479 = vcombine.high %v471, %v471
    %v480 = vcombine.high %v478, %v478
    %489 = vst [vmem:[#allocation3] sm:$0xf] %v453
    %490 = vst [vmem:[#allocation3 + $0x4] sm:$0xf] %v461
    %491 = vst [vmem:[#allocation3 + $0x8] sm:$0xf] %v460
    %492 = vst [vmem:[#allocation3 + $0xc] sm:$0xf] %v462
    %493 = vst [vmem:[#allocation3 + $0x10] sm:$0xf] %v471
    %494 = vst [vmem:[#allocation3 + $0x14] sm:$0xf] %v479
    %495 = vst [vmem:[#allocation3 + $0x18] sm:$0xf] %v478
    %496 = vst [vmem:[#allocation3 + $0x1c] sm:$0xf] %v480
    loop: start=0, step=1, limit=8
    $region42: #{tpu_custom_call.1} parent=1 // loop_pre_header
      _
    $region43: #{tpu_custom_call.1} parent=1 // loop_header
      %s498 = sphi 0, %s502
      %p499 = scmp.ge.s32.totalorder %s498, 8
      %v503 = vphi 0.0, %v647
      %v504 = vphi 0.0, %v641
      %v505 = vphi 0.0, %v786
      %v506 = vphi 0.0, %v780
    $region44: #{tpu_custom_call.1} parent=1 // loop_header_branch
      %501 = sbr.rel (%p499) target = $region48
    $region45: #{tpu_custom_call.1} parent=1 // loop_body
      %s507 = ssub.s32 7, %s498
      %s508 = smul.u32 %s498, 2
      %s509 = smul.addr %s508, 2
      %s510 = scalar_lea.vmem [#allocation2], %s509
      %v511 = vld [vmem:[%s510] sm:$0xf]
      %v512 = vld [vmem:[#allocation10] sm:$0xff]
      %v513 = vld [vmem:[#allocation10 + $0x8] sm:$0xff]
      %v514 = vld [vmem:[#allocation10 + $0x10] sm:$0xff]
      %v515 = vld [vmem:[#allocation10 + $0x18] sm:$0xff]
      %v516 = vld [vmem:[#allocation10 + $0x20] sm:$0xff]
      %v517 = vld [vmem:[#allocation10 + $0x28] sm:$0xff]
      %v518 = vld [vmem:[#allocation10 + $0x30] sm:$0xff]
      %v519 = vld [vmem:[#allocation10 + $0x38] sm:$0xff]
      %v520 = vld [vmem:[#allocation10 + $0x40] sm:$0xff]
      %v521 = vld [vmem:[#allocation10 + $0x48] sm:$0xff]
      %v522 = vld [vmem:[#allocation10 + $0x50] sm:$0xff]
      %v523 = vld [vmem:[#allocation10 + $0x58] sm:$0xff]
      %v524 = vld [vmem:[#allocation10 + $0x60] sm:$0xff]
      %v525 = vld [vmem:[#allocation10 + $0x68] sm:$0xff]
      %v526 = vld [vmem:[#allocation10 + $0x70] sm:$0xff]
      %v527 = vld [vmem:[#allocation10 + $0x78] sm:$0xff]
      %vm528 = vcmask 523264
      %v530 = vsel %vm528, %v503, 0
      %532 = vmatprep.subr.mxu0 0.0
      %533 = vmatpush1.msra.mxu0 0.0
      %534 = vmatprep.subr.mxu0 0.0
      %535 = vmatpush1.msra.mxu0 0.0
      %536 = vmatprep.subr.mxu0 0.0
      %537 = vmatpush1.msra.mxu0 0.0
      %538 = vmatprep.subr.mxu0 0.0
      %539 = vmatpush1.msra.mxu0 0.0
      %540 = vmatprep.subr.mxu0 0.0
      %541 = vmatpush1.msra.mxu0 0.0
      %542 = vmatprep.subr.mxu0 0.0
      %543 = vmatpush1.msra.mxu0 0.0
      %544 = vmatprep.subr.mxu0 0.0
      %545 = vmatpush1.msra.mxu0 0.0
      %546 = vmatprep.subr.mxu0 0.0
      %547 = vmatpush1.msra.mxu0 0.0
      %548 = vmatprep.subr.mxu0 %v527
      %549 = vmatpush1.msra.mxu0 %v526
      %550 = vmatprep.subr.mxu0 %v525
      %551 = vmatpush1.msra.mxu0 %v524
      %552 = vmatprep.subr.mxu0 %v523
      %553 = vmatpush1.msra.mxu0 %v522
      %554 = vmatprep.subr.mxu0 %v521
      %555 = vmatpush1.msra.mxu0 %v520
      %556 = vmatprep.subr.mxu0 %v519
      %557 = vmatpush1.msra.mxu0 %v518
      %558 = vmatprep.subr.mxu0 %v517
      %559 = vmatpush1.msra.mxu0 %v516
      %560 = vmatprep.subr.mxu0 %v515
      %561 = vmatpush1.msra.mxu0 %v514
      %562 = vmatprep.subr.mxu0 %v513
      %563 = vmatpush1.msra.mxu0 %v512
      %564 = vmatprep.subr.mxu0 0.0
      %565 = vmatpush2.msra.mxu0 0.0
      %566 = vmatprep.subr.mxu0 0.0
      %567 = vmatpush2.msra.mxu0 0.0
      %568 = vmatprep.subr.mxu0 0.0
      %569 = vmatpush2.msra.mxu0 0.0
      %570 = vmatprep.subr.mxu0 0.0
      %571 = vmatpush2.msra.mxu0 0.0
      %572 = vmatprep.subr.mxu0 0.0
      %573 = vmatpush2.msra.mxu0 0.0
      %574 = vmatprep.subr.mxu0 0.0
      %575 = vmatpush2.msra.mxu0 0.0
      %576 = vmatprep.subr.mxu0 0.0
      %577 = vmatpush2.msra.mxu0 0.0
      %578 = vmatprep.subr.mxu0 0.0
      %579 = vmatpush2.msra.mxu0 0.0
      %580 = vmatprep.subr.mxu0 0.0
      %581 = vmatpush2.msra.mxu0 0.0
      %582 = vmatprep.subr.mxu0 0.0
      %583 = vmatpush2.msra.mxu0 0.0
      %584 = vmatprep.subr.mxu0 0.0
      %585 = vmatpush2.msra.mxu0 0.0
      %586 = vmatprep.subr.mxu0 0.0
      %587 = vmatpush2.msra.mxu0 0.0
      %588 = vmatprep.subr.mxu0 0.0
      %589 = vmatpush2.msra.mxu0 0.0
      %590 = vmatprep.subr.mxu0 0.0
      %591 = vmatpush2.msra.mxu0 0.0
      %592 = vmatprep.subr.mxu0 0.0
      %593 = vmatpush2.msra.mxu0 0.0
      %594 = vmatprep.subr.mxu0 0.0
      %595 = vmatpush2.msra.mxu0 0.0
      %596 = vmatprep.mubr.f32.mxu0 0.0
      %597 = vmatmul.mubr.f32.gmra.mxu0 %v530
      %v598 = vpop.f32.mrf.mxu0
      %v599 = vadd.f32 0.0, %v598
      %v600 = vpop.f32.mrf.mxu0
      %v601 = vadd.f32 0.0, %v600
      %602 = vdwg.mxu0
      %v605 = vcombine.low %v599, %v601
      %v607 = vunpack.c.l.s4 1983009808
      %v608 = vunpack.c.0.s8 %v607
      %v609 = vlaneseq
      %v610 = vshrl.u32 %v609, 7
      %v611 = vsub.s32 %v608, %v610
      %v612 = vrot.slane %v605, %v611
      %v614 = vadd.f32 %v511, %v612
      %v615 = vxor.u32 %v614, 2147483648
      %v616 = vmul.f32 %v615, 1.442695
      %v617 = vpow.pop %v616
      %v618 = vadd.f32 %v617, 1.0
      %v619 = vrcp.pop %v618
      %v620 = vmul.f32 1.0, %v619
      %v622 = vrot.slane %v614, 2
      %v624 = vtanh.pop %v622
      %625 = vrot.lane.b32.xlu0 %v614, 64
      %v626 = vpop.permute.xlu0 %625
      %v627 = vrot.slane %v626, 2
      %v629 = vxor.u32 %v627, 2147483648
      %v630 = vmul.f32 %v629, 1.442695
      %v631 = vpow.pop %v630
      %v632 = vadd.f32 %v631, 1.0
      %v633 = vrcp.pop %v632
      %v634 = vmul.f32 1.0, %v633
      %v635 = vmul.f32 %v620, %v504
      %v636 = vmul.f32 %v620, %v624
      %638 = vrot.lane.b32.xlu0 %v636, 64
      %v639 = vpop.permute.xlu0 %638
      %v641 = vadd.f32 %v635, %v639
      %v642 = vtanh.pop %v641
      %644 = vrot.lane.b32.xlu0 %v642, 64
      %v645 = vpop.permute.xlu0 %644
      %v647 = vmul.f32 %v634, %v645
      %s648 = smul.u32 %s507, 2
      %s649 = smul.addr %s648, 2
      %s650 = scalar_lea.vmem [#allocation3], %s649
      %v651 = vld [vmem:[%s650] sm:$0xf]
      %v652 = vld [vmem:[#allocation12] sm:$0xff]
      %v653 = vld [vmem:[#allocation12 + $0x8] sm:$0xff]
      %v654 = vld [vmem:[#allocation12 + $0x10] sm:$0xff]
      %v655 = vld [vmem:[#allocation12 + $0x18] sm:$0xff]
      %v656 = vld [vmem:[#allocation12 + $0x20] sm:$0xff]
      %v657 = vld [vmem:[#allocation12 + $0x28] sm:$0xff]
      %v658 = vld [vmem:[#allocation12 + $0x30] sm:$0xff]
      %v659 = vld [vmem:[#allocation12 + $0x38] sm:$0xff]
      %v660 = vld [vmem:[#allocation12 + $0x40] sm:$0xff]
      %v661 = vld [vmem:[#allocation12 + $0x48] sm:$0xff]
      %v662 = vld [vmem:[#allocation12 + $0x50] sm:$0xff]
      %v663 = vld [vmem:[#allocation12 + $0x58] sm:$0xff]
      %v664 = vld [vmem:[#allocation12 + $0x60] sm:$0xff]
      %v665 = vld [vmem:[#allocation12 + $0x68] sm:$0xff]
      %v666 = vld [vmem:[#allocation12 + $0x70] sm:$0xff]
      %v667 = vld [vmem:[#allocation12 + $0x78] sm:$0xff]
      %v669 = vsel %vm528, %v505, 0
      %671 = vmatprep.subr.mxu0 0.0
      %672 = vmatpush1.msra.mxu0 0.0
      %673 = vmatprep.subr.mxu0 0.0
      %674 = vmatpush1.msra.mxu0 0.0
      %675 = vmatprep.subr.mxu0 0.0
      %676 = vmatpush1.msra.mxu0 0.0
      %677 = vmatprep.subr.mxu0 0.0
      %678 = vmatpush1.msra.mxu0 0.0
      %679 = vmatprep.subr.mxu0 0.0
      %680 = vmatpush1.msra.mxu0 0.0
      %681 = vmatprep.subr.mxu0 0.0
      %682 = vmatpush1.msra.mxu0 0.0
      %683 = vmatprep.subr.mxu0 0.0
      %684 = vmatpush1.msra.mxu0 0.0
      %685 = vmatprep.subr.mxu0 0.0
      %686 = vmatpush1.msra.mxu0 0.0
      %687 = vmatprep.subr.mxu0 %v667
      %688 = vmatpush1.msra.mxu0 %v666
      %689 = vmatprep.subr.mxu0 %v665
      %690 = vmatpush1.msra.mxu0 %v664
      %691 = vmatprep.subr.mxu0 %v663
      %692 = vmatpush1.msra.mxu0 %v662
      %693 = vmatprep.subr.mxu0 %v661
      %694 = vmatpush1.msra.mxu0 %v660
      %695 = vmatprep.subr.mxu0 %v659
      %696 = vmatpush1.msra.mxu0 %v658
      %697 = vmatprep.subr.mxu0 %v657
      %698 = vmatpush1.msra.mxu0 %v656
      %699 = vmatprep.subr.mxu0 %v655
      %700 = vmatpush1.msra.mxu0 %v654
      %701 = vmatprep.subr.mxu0 %v653
      %702 = vmatpush1.msra.mxu0 %v652
      %703 = vmatprep.subr.mxu0 0.0
      %704 = vmatpush2.msra.mxu0 0.0
      %705 = vmatprep.subr.mxu0 0.0
      %706 = vmatpush2.msra.mxu0 0.0
      %707 = vmatprep.subr.mxu0 0.0
      %708 = vmatpush2.msra.mxu0 0.0
      %709 = vmatprep.subr.mxu0 0.0
      %710 = vmatpush2.msra.mxu0 0.0
      %711 = vmatprep.subr.mxu0 0.0
      %712 = vmatpush2.msra.mxu0 0.0
      %713 = vmatprep.subr.mxu0 0.0
      %714 = vmatpush2.msra.mxu0 0.0
      %715 = vmatprep.subr.mxu0 0.0
      %716 = vmatpush2.msra.mxu0 0.0
      %717 = vmatprep.subr.mxu0 0.0
      %718 = vmatpush2.msra.mxu0 0.0
      %719 = vmatprep.subr.mxu0 0.0
      %720 = vmatpush2.msra.mxu0 0.0
      %721 = vmatprep.subr.mxu0 0.0
      %722 = vmatpush2.msra.mxu0 0.0
      %723 = vmatprep.subr.mxu0 0.0
      %724 = vmatpush2.msra.mxu0 0.0
      %725 = vmatprep.subr.mxu0 0.0
      %726 = vmatpush2.msra.mxu0 0.0
      %727 = vmatprep.subr.mxu0 0.0
      %728 = vmatpush2.msra.mxu0 0.0
      %729 = vmatprep.subr.mxu0 0.0
      %730 = vmatpush2.msra.mxu0 0.0
      %731 = vmatprep.subr.mxu0 0.0
      %732 = vmatpush2.msra.mxu0 0.0
      %733 = vmatprep.subr.mxu0 0.0
      %734 = vmatpush2.msra.mxu0 0.0
      %735 = vmatprep.mubr.f32.mxu0 0.0
      %736 = vmatmul.mubr.f32.gmra.mxu0 %v669
      %v737 = vpop.f32.mrf.mxu0
      %v738 = vadd.f32 0.0, %v737
      %v739 = vpop.f32.mrf.mxu0
      %v740 = vadd.f32 0.0, %v739
      %741 = vdwg.mxu0
      %v744 = vcombine.low %v738, %v740
      %v746 = vunpack.c.l.s4 1983009808
      %v747 = vunpack.c.0.s8 %v746
      %v748 = vlaneseq
      %v749 = vshrl.u32 %v748, 7
      %v750 = vsub.s32 %v747, %v749
      %v751 = vrot.slane %v744, %v750
      %v753 = vadd.f32 %v651, %v751
      %v754 = vxor.u32 %v753, 2147483648
      %v755 = vmul.f32 %v754, 1.442695
      %v756 = vpow.pop %v755
      %v757 = vadd.f32 %v756, 1.0
      %v758 = vrcp.pop %v757
      %v759 = vmul.f32 1.0, %v758
      %v761 = vrot.slane %v753, 2
      %v763 = vtanh.pop %v761
      %764 = vrot.lane.b32.xlu0 %v753, 64
      %v765 = vpop.permute.xlu0 %764
      %v766 = vrot.slane %v765, 2
      %v768 = vxor.u32 %v766, 2147483648
      %v769 = vmul.f32 %v768, 1.442695
      %v770 = vpow.pop %v769
      %v771 = vadd.f32 %v770, 1.0
      %v772 = vrcp.pop %v771
      %v773 = vmul.f32 1.0, %v772
      %v774 = vmul.f32 %v759, %v506
      %v775 = vmul.f32 %v759, %v763
      %777 = vrot.lane.b32.xlu0 %v775, 64
      %v778 = vpop.permute.xlu0 %777
      %v780 = vadd.f32 %v774, %v778
      %v781 = vtanh.pop %v780
      %783 = vrot.lane.b32.xlu0 %v781, 64
      %v784 = vpop.permute.xlu0 %783
      %v786 = vmul.f32 %v773, %v784
      %s787 = scalar_lea.vmem [#allocation13], %s508
      %vm788 = vcmask 517120
      %789 = vst.msk [vmem:[%s787] sm:$0x3] %vm788, %v647
      %s790 = scalar_lea.vmem [#allocation14], %s648
      %791 = vst.msk [vmem:[%s790] sm:$0x3] %vm788, %v786
    $region46: #{tpu_custom_call.1} parent=1 // loop_footer
      %s502 = sadd.s32 1, %s498
    $region47: #{tpu_custom_call.1} parent=1 // loop_footer_branch
      %497 = sbr.rel target = $region43
    $region48: #{tpu_custom_call.1} parent=1 // loop_exit
      _
    %vm792 = vcmask 517120
    %793 = vst.msk [vmem:[#allocation16] sm:$0x3] %vm792, %v503
    %s794 = scalar_lea.vmem [#allocation16], 2
    %795 = vst.msk [vmem:[%s794] sm:$0x3] %vm792, %v505
    %v798 = vunpack.c.l.s4 1983009808
    %v799 = vunpack.c.0.s8 %v798
    %v800 = vlaneseq
    %v801 = vshrl.u32 %v800, 7
    %v802 = vsub.s32 %v799, %v801
    %v803 = vrot.slane %v504, %v802
    %804 = vrot.lane.b32.xlu0 %v803, 64
    %v805 = vpop.permute.xlu0 %804
    %807 = vst.msk [vmem:[#allocation17] sm:$0x3] %vm792, %v805
    %v810 = vunpack.c.l.s4 1983009808
    %v811 = vunpack.c.0.s8 %v810
    %v812 = vlaneseq
    %v813 = vshrl.u32 %v812, 7
    %v814 = vsub.s32 %v811, %v813
    %v815 = vrot.slane %v506, %v814
    %816 = vrot.lane.b32.xlu0 %v815, 64
    %v817 = vpop.permute.xlu0 %816
    %s819 = scalar_lea.vmem [#allocation17], 2
    %820 = vst.msk [vmem:[%s819] sm:$0x3] %vm792, %v817
    // Predicated region
    $region49: #{tpu_custom_call.1} parent=1 // pred_check
      _
    $region50: #{tpu_custom_call.1} parent=1 // pred_check_branch
      %822 = sbr.rel (0) target = $region52
    $region51: #{tpu_custom_call.1} parent=1 // pred_region
      %s824 = ssub.s32 256, 256
      %825 = vsyncadd [#allocation6], %s824
      %s826 = sshll.u32 [#allocation13], 4
      %s827 = int_to_ptr.vmem [resolvable:$true] %s826
      %832 = dma.vmem_to_hbm [thread:$0]  %s827, 256, %s5, [#allocation6], 32, 32, 2
    $region52: #{tpu_custom_call.1} parent=1 // pred_fallthru
      _
    // Predicated region
    $region53: #{tpu_custom_call.1} parent=1 // pred_check
      _
    $region54: #{tpu_custom_call.1} parent=1 // pred_check_branch
      %834 = sbr.rel (0) target = $region56
    $region55: #{tpu_custom_call.1} parent=1 // pred_region
      %s836 = ssub.s32 256, 256
      %837 = vsyncadd [#allocation15], %s836
      %s838 = sshll.u32 [#allocation14], 4
      %s839 = int_to_ptr.vmem [resolvable:$true] %s838
      %844 = dma.vmem_to_hbm [thread:$0]  %s839, 256, %s6, [#allocation15], 32, 32, 2
    $region56: #{tpu_custom_call.1} parent=1 // pred_fallthru
      _
    // Predicated region
    $region57: #{tpu_custom_call.1} parent=1 // pred_check
      _
    $region58: #{tpu_custom_call.1} parent=1 // pred_check_branch
      %846 = sbr.rel (0) target = $region60
    $region59: #{tpu_custom_call.1} parent=1 // pred_region
      %s848 = ssub.s32 64, 64
      %849 = vsyncadd [#allocation15], %s848
      %s850 = sshll.u32 [#allocation16], 4
      %s851 = int_to_ptr.vmem [resolvable:$true] %s850
      %856 = dma.vmem_to_hbm [thread:$0]  %s851, 64, %s7, [#allocation15], 32, 32, 2
    $region60: #{tpu_custom_call.1} parent=1 // pred_fallthru
      _
    // Predicated region
    $region61: #{tpu_custom_call.1} parent=1 // pred_check
      _
    $region62: #{tpu_custom_call.1} parent=1 // pred_check_branch
      %858 = sbr.rel (0) target = $region64
    $region63: #{tpu_custom_call.1} parent=1 // pred_region
      %s860 = ssub.s32 64, 64
      %861 = vsyncadd [#allocation18], %s860
      %s862 = sshll.u32 [#allocation17], 4
      %s863 = int_to_ptr.vmem [resolvable:$true] %s862
      %868 = dma.vmem_to_hbm [thread:$0]  %s863, 64, %s8, [#allocation18], 32, 32, 2
    $region64: #{tpu_custom_call.1} parent=1 // pred_fallthru
      _
    // Predicated region
    $region65: #{tpu_custom_call.1} parent=1 // pred_check
      _
    $region66: #{tpu_custom_call.1} parent=1 // pred_check_branch
      %870 = sbr.rel (0) target = $region68
    $region67: #{tpu_custom_call.1} parent=1 // pred_region
      %871 = dma.done [#allocation6], 256
    $region68: #{tpu_custom_call.1} parent=1 // pred_fallthru
      _
    // Predicated region
    $region69: #{tpu_custom_call.1} parent=1 // pred_check
      _
    $region70: #{tpu_custom_call.1} parent=1 // pred_check_branch
      %873 = sbr.rel (0) target = $region72
    $region71: #{tpu_custom_call.1} parent=1 // pred_region
      %874 = dma.done [#allocation15], 256
    $region72: #{tpu_custom_call.1} parent=1 // pred_fallthru
      _
    // Predicated region
    $region73: #{tpu_custom_call.1} parent=1 // pred_check
      _
    $region74: #{tpu_custom_call.1} parent=1 // pred_check_branch
      %876 = sbr.rel (0) target = $region76
    $region75: #{tpu_custom_call.1} parent=1 // pred_region
      %877 = dma.done [#allocation15], 64
    $region76: #{tpu_custom_call.1} parent=1 // pred_fallthru
      _
    // Predicated region
    $region77: #{tpu_custom_call.1} parent=1 // pred_check
      _
    $region78: #{tpu_custom_call.1} parent=1 // pred_check_branch
      %879 = sbr.rel (0) target = $region80
    $region79: #{tpu_custom_call.1} parent=1 // pred_region
      %880 = dma.done [#allocation18], 64
    $region80: #{tpu_custom_call.1} parent=1 // pred_fallthru
      _
    %881 = vsyncpa [#allocation5], 1
    %882 = vsyncpa [#allocation8], 1
    %883 = vsyncpa [#allocation11], 1
    %884 = vsyncpa [#allocation6], 1
    %885 = vsyncpa [#allocation15], 1
    %886 = vsyncpa [#allocation18], 1

</llo_original>
